<compile_context>
chip_gen: v6e
topology: v6e:2x2x1
jax: 0.10.0
libtpu: 0.0.40
codegen_flags: <defaults>
</compile_context>

<pallas_src>
import jax
import jax.numpy as jnp
from jax.experimental import pallas as pl
from jax.experimental.pallas import tpu as pltpu

STATE_DIM = 2
HIDDEN_DIM = 128 * 2
ACTION_DIM = 4


def qnet_kernel(x_ref, w1_ref, b1_ref, w2_ref, b2_ref, o_ref):
    x = x_ref[...]                      # (TB, STATE_DIM)
    w1 = w1_ref[...]                    # (STATE_DIM, HIDDEN_DIM)

    # fc1 on the VPU: K=2 contraction as an unrolled broadcast multiply-add.
    h = x[:, 0:1] * w1[0:1, :]
    for k in range(1, STATE_DIM):
        h = h + x[:, k:k + 1] * w1[k:k + 1, :]
    h = jnp.maximum(h + b1_ref[...], jnp.float32(0.0))   # bias + ReLU, f32

    # fc2 on the MXU: (TB, 256) @ (256, 4), f32 accumulate.
    out = jnp.dot(h, w2_ref[...], preferred_element_type=jnp.float32)
    o_ref[...] = (out + b2_ref[...]).astype(o_ref.dtype)


def prepare_params(w1, b1, w2, b2):
    """One-time conversion from PyTorch layout ([out,in] weights, [out] biases)
    to kernel layout ([in,out] weights, [1,out] biases). Call once at init /
    after each parameter update, NOT per forward call."""
    return (jnp.transpose(w1),            # (STATE_DIM, HIDDEN_DIM)
            b1.reshape(1, -1),            # (1, HIDDEN_DIM)
            jnp.transpose(w2),            # (HIDDEN_DIM, ACTION_DIM)
            b2.reshape(1, -1))            # (1, ACTION_DIM)


def qnet_forward(x, prepared_params, *, max_tb=1024):
    """x: [B, STATE_DIM] f32; prepared_params: output of prepare_params()."""
    w1_t, b1_2d, w2_t, b2_2d = prepared_params
    B = x.shape[0]

    # Batch tile: multiple of 8 (sublane), capped so it fits every chip's VMEM.
    TB = min(max_tb, max(8, ((B + 7) // 8) * 8))
    grid = (pl.cdiv(B, TB),)

    resident = lambda shape: pl.BlockSpec(shape, lambda i: (0,) * len(shape))

    return pl.pallas_call(
        qnet_kernel,
        out_shape=jax.ShapeDtypeStruct((B, ACTION_DIM), x.dtype),
        grid=grid,
        in_specs=[
            pl.BlockSpec((TB, STATE_DIM), lambda i: (i, 0)),   # x: tiled over batch
            resident(w1_t.shape),                              # weights resident
            resident(b1_2d.shape),
            resident(w2_t.shape),
            resident(b2_2d.shape),
        ],
        out_specs=pl.BlockSpec((TB, ACTION_DIM), lambda i: (i, 0)),
        compiler_params=pltpu.CompilerParams(
            dimension_semantics=("parallel",)),
    )(x, w1_t, b1_2d, w2_t, b2_2d)


def init_params(key):
    """Deterministic init mimicking PyTorch Linear default (uniform ±1/sqrt(fan_in)),
    in PyTorch layout."""
    k1, k2, k3, k4 = jax.random.split(key, 4)
    bound1 = 1.0 / (STATE_DIM ** 0.5)
    bound2 = 1.0 / (HIDDEN_DIM ** 0.5)
    w1 = jax.random.uniform(k1, (HIDDEN_DIM, STATE_DIM), jnp.float32,
                            -bound1, bound1)
    b1 = jax.random.uniform(k2, (HIDDEN_DIM,), jnp.float32, -bound1, bound1)
    w2 = jax.random.uniform(k3, (ACTION_DIM, HIDDEN_DIM), jnp.float32,
                            -bound2, bound2)
    b2 = jax.random.uniform(k4, (ACTION_DIM,), jnp.float32, -bound2, bound2)
    return w1, b1, w2, b2


def qnet_reference(x, w1, b1, w2, b2):
    h = jnp.maximum(x @ w1.T + b1, 0.0)
    return h @ w2.T + b2


if __name__ == "__main__":
    key = jax.random.PRNGKey(0)
    k_params, k_x = jax.random.split(key)
    w1, b1, w2, b2 = init_params(k_params)

    # One-time parameter preparation (hoisted out of the per-call forward).
    prepared = prepare_params(w1, b1, w2, b2)
    prepared = jax.tree_util.tree_map(jax.block_until_ready, prepared)

    batch = 8
    # CliffWalking states are (row, col)-style 2-vectors; use small floats.
    x = jax.random.uniform(k_x, (batch, STATE_DIM), jnp.float32, 0.0, 4.0)

    out = qnet_forward(x, prepared)
    out = jax.block_until_ready(out)

    ref = qnet_reference(x, w1, b1, w2, b2)
    assert out.shape == (batch, ACTION_DIM)
    assert jnp.allclose(out, ref, atol=1e-5, rtol=1e-5), "mismatch vs JAX reference"

    # Also exercise a larger, multi-tile batch to validate the grid path.
    xb = jax.random.uniform(jax.random.PRNGKey(1), (2048 + 40, STATE_DIM),
                            jnp.float32, 0.0, 4.0)
    outb = jax.block_until_ready(qnet_forward(xb, prepared))
    refb = qnet_reference(xb, w1, b1, w2, b2)
    assert jnp.allclose(outb, refb, atol=1e-5, rtol=1e-5), "mismatch (large batch)"

    print("KERNEL_OK")
</pallas_src>

<mosaic_0001>
module attributes {stable_mosaic.version = 11 : i64} {
  func.func @qnet_kernel(%arg0: i32, %arg1: memref<8x2xf32, #tpu.memory_space<vmem>>, %arg2: memref<2x256xf32, #tpu.memory_space<vmem>>, %arg3: memref<1x256xf32, #tpu.memory_space<vmem>>, %arg4: memref<256x4xf32, #tpu.memory_space<vmem>>, %arg5: memref<1x4xf32, #tpu.memory_space<vmem>>, %arg6: memref<8x4xf32, #tpu.memory_space<vmem>>) attributes {dimension_semantics = [#tpu.dimension_semantics<parallel>], iteration_bounds = array<i64: 1>, scalar_prefetch = 0 : i64, scratch_operands = 0 : i64, tpu.core_type = #tpu.core_type<tc>, window_params = [{transform_indices = @transform_0, window_bounds = array<i64: 8, 2>}, {pipeline_mode = #tpu.pipeline_mode<synchronous>, transform_indices = @transform_1, window_bounds = array<i64: 2, 256>}, {pipeline_mode = #tpu.pipeline_mode<synchronous>, transform_indices = @transform_2, window_bounds = array<i64: 1, 256>}, {pipeline_mode = #tpu.pipeline_mode<synchronous>, transform_indices = @transform_3, window_bounds = array<i64: 256, 4>}, {pipeline_mode = #tpu.pipeline_mode<synchronous>, transform_indices = @transform_4, window_bounds = array<i64: 1, 4>}, {transform_indices = @transform_5, window_bounds = array<i64: 8, 4>}]} {
    %c0 = arith.constant 0 : index
    %c0_0 = arith.constant 0 : index
    %0 = vector.load %arg1[%c0, %c0_0] : memref<8x2xf32, #tpu.memory_space<vmem>>, vector<8x2xf32>
    %c0_1 = arith.constant 0 : index
    %c0_2 = arith.constant 0 : index
    %1 = vector.load %arg2[%c0_1, %c0_2] : memref<2x256xf32, #tpu.memory_space<vmem>>, vector<2x256xf32>
    %2 = vector.extract_strided_slice %0 {offsets = [0, 0], sizes = [8, 1], strides = [1, 1]} : vector<8x2xf32> to vector<8x1xf32>
    %3 = vector.extract_strided_slice %1 {offsets = [0, 0], sizes = [1, 256], strides = [1, 1]} : vector<2x256xf32> to vector<1x256xf32>
    %4 = vector.broadcast %2 : vector<8x1xf32> to vector<8x256xf32>
    %5 = vector.broadcast %3 : vector<1x256xf32> to vector<8x256xf32>
    %6 = arith.mulf %4, %5 : vector<8x256xf32>
    %7 = vector.extract_strided_slice %0 {offsets = [0, 1], sizes = [8, 1], strides = [1, 1]} : vector<8x2xf32> to vector<8x1xf32>
    %8 = vector.extract_strided_slice %1 {offsets = [1, 0], sizes = [1, 256], strides = [1, 1]} : vector<2x256xf32> to vector<1x256xf32>
    %9 = vector.broadcast %7 : vector<8x1xf32> to vector<8x256xf32>
    %10 = vector.broadcast %8 : vector<1x256xf32> to vector<8x256xf32>
    %11 = arith.mulf %9, %10 : vector<8x256xf32>
    %12 = arith.addf %6, %11 : vector<8x256xf32>
    %c0_3 = arith.constant 0 : index
    %c0_4 = arith.constant 0 : index
    %13 = vector.load %arg3[%c0_3, %c0_4] : memref<1x256xf32, #tpu.memory_space<vmem>>, vector<1x256xf32>
    %14 = vector.broadcast %13 : vector<1x256xf32> to vector<8x256xf32>
    %15 = arith.addf %12, %14 : vector<8x256xf32>
    %cst = arith.constant 0.000000e+00 : f32
    %16 = vector.broadcast %cst : f32 to vector<8x256xf32>
    %17 = arith.maximumf %15, %16 : vector<8x256xf32>
    %c0_5 = arith.constant 0 : index
    %c0_6 = arith.constant 0 : index
    %18 = vector.load %arg4[%c0_5, %c0_6] : memref<256x4xf32, #tpu.memory_space<vmem>>, vector<256x4xf32>
    %cst_7 = arith.constant dense<0.000000e+00> : vector<8x4xf32>
    %19 = tpu.matmul %17, %18, %cst_7 {dimension_numbers = #tpu.dot_dimension_numbers<[1], [0], [0], [1], [0, 0, 1, 1], [], []>} : vector<8x256xf32>, vector<256x4xf32>, vector<8x4xf32> -> vector<8x4xf32>
    %c0_8 = arith.constant 0 : index
    %c0_9 = arith.constant 0 : index
    %20 = vector.load %arg5[%c0_8, %c0_9] : memref<1x4xf32, #tpu.memory_space<vmem>>, vector<1x4xf32>
    %21 = vector.broadcast %20 : vector<1x4xf32> to vector<8x4xf32>
    %22 = arith.addf %19, %21 : vector<8x4xf32>
    %c0_10 = arith.constant 0 : index
    %c0_11 = arith.constant 0 : index
    %23 = vector.load %arg6[%c0_10, %c0_11] : memref<8x4xf32, #tpu.memory_space<vmem>>, vector<8x4xf32>
    tpu.vector_store %arg6[%c0_10, %c0_11], %22 {strides = array<i32>} : memref<8x4xf32, #tpu.memory_space<vmem>>, vector<8x4xf32>,
    return
  }
  func.func @transform_0(%arg0: i32) -> (i32, i32) {
    %c0_i32 = arith.constant 0 : i32
    %c0_i32_0 = arith.constant 0 : i32
    return %arg0, %c0_i32 : i32, i32
  }
  func.func @transform_1(%arg0: i32) -> (i32, i32) {
    %c0_i32 = arith.constant 0 : i32
    %c0_i32_0 = arith.constant 0 : i32
    %c0_i32_1 = arith.constant 0 : i32
    return %c0_i32, %c0_i32_0 : i32, i32
  }
  func.func @transform_2(%arg0: i32) -> (i32, i32) {
    %c0_i32 = arith.constant 0 : i32
    %c0_i32_0 = arith.constant 0 : i32
    %c0_i32_1 = arith.constant 0 : i32
    return %c0_i32, %c0_i32_0 : i32, i32
  }
  func.func @transform_3(%arg0: i32) -> (i32, i32) {
    %c0_i32 = arith.constant 0 : i32
    %c0_i32_0 = arith.constant 0 : i32
    %c0_i32_1 = arith.constant 0 : i32
    return %c0_i32, %c0_i32_0 : i32, i32
  }
  func.func @transform_4(%arg0: i32) -> (i32, i32) {
    %c0_i32 = arith.constant 0 : i32
    %c0_i32_0 = arith.constant 0 : i32
    %c0_i32_1 = arith.constant 0 : i32
    return %c0_i32, %c0_i32_0 : i32, i32
  }
  func.func @transform_5(%arg0: i32) -> (i32, i32) {
    %c0_i32 = arith.constant 0 : i32
    %c0_i32_0 = arith.constant 0 : i32
    return %arg0, %c0_i32 : i32, i32
  }
}

</mosaic_0001>

<llo_original>
// kernel: tpu_custom_call.1
$region0: #{tpu_custom_call.1}
  #allocation0 [shape = 'u32[]', space=smem, size = 0x4, offset = 0x4, fixed_abs, tag = 'smem constant byte address 0x4 - core index']
  #allocation1 [shape = 'u32[144,128]{1,0:T(1,128)}', space=vmem, size = 0x12000, scoped, tag = 'internal scratch']
  %s0 = inlined_call_operand.vmem [shape: f32[8,2], index: 0, kind: input, shape index: {}]
  %s1 = inlined_call_operand.vmem [shape: f32[2,256], index: 1, kind: input, shape index: {}]
  %s2 = inlined_call_operand.vmem [shape: f32[1,256], index: 2, kind: input, shape index: {}]
  %s3 = inlined_call_operand.vmem [shape: f32[256,4], index: 3, kind: input, shape index: {}]
  %s4 = inlined_call_operand.vmem [shape: f32[1,4], index: 4, kind: input, shape index: {}]
  %s5 = inlined_call_operand.vmem [shape: f32[8,4], index: 5, kind: output, shape index: {}]
  %s6 = sld [smem:[#allocation0]]
  $region30: #{tpu_custom_call.1} parent=0
    _
  %s8 = ssub.s32 1, %s6
  %s9 = scalar_select 0, %s8, %s6
  // Predicated region
  $region2: #{tpu_custom_call.1} parent=0 // pred_check
    _
  $region3: #{tpu_custom_call.1} parent=0 // pred_check_branch
    %11 = sbr.rel (0) target = $region5
  $region4: #{tpu_custom_call.1} parent=0 // pred_region
    _
  $region5: #{tpu_custom_call.1} parent=0 // pred_fallthru
    _
  // Predicated region
  $region6: #{tpu_custom_call.1} parent=0 // pred_check
    _
  $region7: #{tpu_custom_call.1} parent=0 // pred_check_branch
    %13 = sbr.rel (0) target = $region9
  $region8: #{tpu_custom_call.1} parent=0 // pred_region
    _
  $region9: #{tpu_custom_call.1} parent=0 // pred_fallthru
    _
  // Predicated region
  $region10: #{tpu_custom_call.1} parent=0 // pred_check
    _
  $region11: #{tpu_custom_call.1} parent=0 // pred_check_branch
    %15 = sbr.rel (0) target = $region13
  $region12: #{tpu_custom_call.1} parent=0 // pred_region
    _
  $region13: #{tpu_custom_call.1} parent=0 // pred_fallthru
    _
  // Predicated region
  $region14: #{tpu_custom_call.1} parent=0 // pred_check
    _
  $region15: #{tpu_custom_call.1} parent=0 // pred_check_branch
    %17 = sbr.rel (0) target = $region17
  $region16: #{tpu_custom_call.1} parent=0 // pred_region
    _
  $region17: #{tpu_custom_call.1} parent=0 // pred_fallthru
    _
  // Predicated region
  $region18: #{tpu_custom_call.1} parent=0 // pred_check
    _
  $region19: #{tpu_custom_call.1} parent=0 // pred_check_branch
    %19 = sbr.rel (0) target = $region21
  $region20: #{tpu_custom_call.1} parent=0 // pred_region
    _
  $region21: #{tpu_custom_call.1} parent=0 // pred_fallthru
    _
  %v20 = vld [vmem:[%s0] sm:$0xff]
  %v21 = vld [vmem:[%s1] sm:$0xf]
  %23 = vset.pattern.permute.xlu0 0
  %24 = vperm.xlu0 %23, %v20
  %v25 = vpop.permute.xlu0 %24
  %v28 = vlaneseq
  %v29 = vshrl.u32 %v28, 7
  %v30 = vsub.s32 0, %v29
  %v31 = vrot.slane %v21, %v30
  %v32 = vlaneseq
  %v33 = vshrl.u32 %v32, 7
  %v34 = vsub.s32 2, %v33
  %v35 = vrot.slane %v21, %v34
  %v38 = vlaneseq
  %v39 = vshrl.u32 %v38, 7
  %v40 = vsub.s32 0, %v39
  %v41 = vrot.slane %v31, %v40
  %v42 = vlaneseq
  %v43 = vshrl.u32 %v42, 7
  %v44 = vsub.s32 0, %v43
  %v45 = vrot.slane %v35, %v44
  %v46 = vmul.f32 %v25, %v41
  %v47 = vmul.f32 %v25, %v45
  %48 = vset.pattern.permute.xlu0 1
  %49 = vperm.xlu0 %48, %v20
  %v50 = vpop.permute.xlu0 %49
  %v52 = vlaneseq
  %v53 = vshrl.u32 %v52, 7
  %v54 = vsub.s32 1, %v53
  %v55 = vrot.slane %v21, %v54
  %v56 = vlaneseq
  %v57 = vshrl.u32 %v56, 7
  %v58 = vsub.s32 3, %v57
  %v59 = vrot.slane %v21, %v58
  %v62 = vlaneseq
  %v63 = vshrl.u32 %v62, 7
  %v64 = vsub.s32 1, %v63
  %v65 = vrot.slane %v55, %v64
  %v66 = vlaneseq
  %v67 = vshrl.u32 %v66, 7
  %v68 = vsub.s32 1, %v67
  %v69 = vrot.slane %v59, %v68
  %v70 = vmul.f32 %v50, %v65
  %v71 = vmul.f32 %v50, %v69
  %v72 = vadd.f32 %v46, %v70
  %v73 = vadd.f32 %v47, %v71
  %v74 = vld [vmem:[%s2] sm:$0x3]
  %v76 = vlaneseq
  %v77 = vshrl.u32 %v76, 7
  %v78 = vsub.s32 0, %v77
  %v79 = vrot.slane %v74, %v78
  %v80 = vlaneseq
  %v81 = vshrl.u32 %v80, 7
  %v82 = vsub.s32 1, %v81
  %v83 = vrot.slane %v74, %v82
  %v86 = vadd.f32 %v72, %v79
  %v87 = vadd.f32 %v73, %v83
  %v88 = vmax.f32 %v86, 0.0
  %v89 = vmax.f32 %v87, 0.0
  %v90 = vld [vmem:[%s3] sm:$0xff]
  %v91 = vld [vmem:[%s3 + $0x8] sm:$0xff]
  %v92 = vld [vmem:[%s3 + $0x10] sm:$0xff]
  %v93 = vld [vmem:[%s3 + $0x18] sm:$0xff]
  %v94 = vld [vmem:[%s3 + $0x20] sm:$0xff]
  %v95 = vld [vmem:[%s3 + $0x28] sm:$0xff]
  %v96 = vld [vmem:[%s3 + $0x30] sm:$0xff]
  %v97 = vld [vmem:[%s3 + $0x38] sm:$0xff]
  %v98 = vld [vmem:[%s3 + $0x40] sm:$0xff]
  %v99 = vld [vmem:[%s3 + $0x48] sm:$0xff]
  %v100 = vld [vmem:[%s3 + $0x50] sm:$0xff]
  %v101 = vld [vmem:[%s3 + $0x58] sm:$0xff]
  %v102 = vld [vmem:[%s3 + $0x60] sm:$0xff]
  %v103 = vld [vmem:[%s3 + $0x68] sm:$0xff]
  %v104 = vld [vmem:[%s3 + $0x70] sm:$0xff]
  %v105 = vld [vmem:[%s3 + $0x78] sm:$0xff]
  %v106 = vld [vmem:[%s3 + $0x80] sm:$0xff]
  %v107 = vld [vmem:[%s3 + $0x88] sm:$0xff]
  %v108 = vld [vmem:[%s3 + $0x90] sm:$0xff]
  %v109 = vld [vmem:[%s3 + $0x98] sm:$0xff]
  %v110 = vld [vmem:[%s3 + $0xa0] sm:$0xff]
  %v111 = vld [vmem:[%s3 + $0xa8] sm:$0xff]
  %v112 = vld [vmem:[%s3 + $0xb0] sm:$0xff]
  %v113 = vld [vmem:[%s3 + $0xb8] sm:$0xff]
  %v114 = vld [vmem:[%s3 + $0xc0] sm:$0xff]
  %v115 = vld [vmem:[%s3 + $0xc8] sm:$0xff]
  %v116 = vld [vmem:[%s3 + $0xd0] sm:$0xff]
  %v117 = vld [vmem:[%s3 + $0xd8] sm:$0xff]
  %v118 = vld [vmem:[%s3 + $0xe0] sm:$0xff]
  %v119 = vld [vmem:[%s3 + $0xe8] sm:$0xff]
  %v120 = vld [vmem:[%s3 + $0xf0] sm:$0xff]
  %v121 = vld [vmem:[%s3 + $0xf8] sm:$0xff]
  %v122 = vld [vmem:[%s4] sm:$0x1]
  %v124 = vlaneseq
  %v125 = vshrl.u32 %v124, 7
  %v126 = vsub.s32 0, %v125
  %v127 = vrot.slane %v122, %v126
  %129 = vmatprep.subr.mxu0 0.0
  %130 = vmatpush1.msra.mxu0 %v105
  %131 = vmatprep.subr.mxu0 0.0
  %132 = vmatpush1.msra.mxu0 %v104
  %133 = vmatprep.subr.mxu0 0.0
  %134 = vmatpush1.msra.mxu0 %v103
  %135 = vmatprep.subr.mxu0 0.0
  %136 = vmatpush1.msra.mxu0 %v102
  %137 = vmatprep.subr.mxu0 0.0
  %138 = vmatpush1.msra.mxu0 %v101
  %139 = vmatprep.subr.mxu0 0.0
  %140 = vmatpush1.msra.mxu0 %v100
  %141 = vmatprep.subr.mxu0 0.0
  %142 = vmatpush1.msra.mxu0 %v99
  %143 = vmatprep.subr.mxu0 0.0
  %144 = vmatpush1.msra.mxu0 %v98
  %145 = vmatprep.subr.mxu0 0.0
  %146 = vmatpush1.msra.mxu0 %v97
  %147 = vmatprep.subr.mxu0 0.0
  %148 = vmatpush1.msra.mxu0 %v96
  %149 = vmatprep.subr.mxu0 0.0
  %150 = vmatpush1.msra.mxu0 %v95
  %151 = vmatprep.subr.mxu0 0.0
  %152 = vmatpush1.msra.mxu0 %v94
  %153 = vmatprep.subr.mxu0 0.0
  %154 = vmatpush1.msra.mxu0 %v93
  %155 = vmatprep.subr.mxu0 0.0
  %156 = vmatpush1.msra.mxu0 %v92
  %157 = vmatprep.subr.mxu0 0.0
  %158 = vmatpush1.msra.mxu0 %v91
  %159 = vmatprep.subr.mxu0 0.0
  %160 = vmatpush1.msra.mxu0 %v90
  %161 = vmatprep.subr.mxu0 0.0
  %162 = vmatpush2.msra.mxu0 %v121
  %163 = vmatprep.subr.mxu0 0.0
  %164 = vmatpush2.msra.mxu0 %v120
  %165 = vmatprep.subr.mxu0 0.0
  %166 = vmatpush2.msra.mxu0 %v119
  %167 = vmatprep.subr.mxu0 0.0
  %168 = vmatpush2.msra.mxu0 %v118
  %169 = vmatprep.subr.mxu0 0.0
  %170 = vmatpush2.msra.mxu0 %v117
  %171 = vmatprep.subr.mxu0 0.0
  %172 = vmatpush2.msra.mxu0 %v116
  %173 = vmatprep.subr.mxu0 0.0
  %174 = vmatpush2.msra.mxu0 %v115
  %175 = vmatprep.subr.mxu0 0.0
  %176 = vmatpush2.msra.mxu0 %v114
  %177 = vmatprep.subr.mxu0 0.0
  %178 = vmatpush2.msra.mxu0 %v113
  %179 = vmatprep.subr.mxu0 0.0
  %180 = vmatpush2.msra.mxu0 %v112
  %181 = vmatprep.subr.mxu0 0.0
  %182 = vmatpush2.msra.mxu0 %v111
  %183 = vmatprep.subr.mxu0 0.0
  %184 = vmatpush2.msra.mxu0 %v110
  %185 = vmatprep.subr.mxu0 0.0
  %186 = vmatpush2.msra.mxu0 %v109
  %187 = vmatprep.subr.mxu0 0.0
  %188 = vmatpush2.msra.mxu0 %v108
  %189 = vmatprep.subr.mxu0 0.0
  %190 = vmatpush2.msra.mxu0 %v107
  %191 = vmatprep.subr.mxu0 0.0
  %192 = vmatpush2.msra.mxu0 %v106
  %193 = vmatprep.mubr.f32.mxu0 %v89
  %194 = vmatmul.mubr.f32.gmra.mxu0 %v88
  %v195 = vpop.f32.mrf.mxu0
  %v196 = vadd.f32 %v127, %v195
  %v197 = vpop.f32.mrf.mxu0
  %198 = vdwg.mxu0
  %vm199 = vcmask 31744
  %200 = vst.msk [vmem:[%s5] sm:$0xff] %vm199, %v196
  // Predicated region
  $region22: #{tpu_custom_call.1} parent=0 // pred_check
    _
  $region23: #{tpu_custom_call.1} parent=0 // pred_check_branch
    %202 = sbr.rel (0) target = $region25
  $region24: #{tpu_custom_call.1} parent=0 // pred_region
    _
  $region25: #{tpu_custom_call.1} parent=0 // pred_fallthru
    _
  // Predicated region
  $region26: #{tpu_custom_call.1} parent=0 // pred_check
    _
  $region27: #{tpu_custom_call.1} parent=0 // pred_check_branch
    %204 = sbr.rel (0) target = $region29
  $region28: #{tpu_custom_call.1} parent=0 // pred_region
    _
  $region29: #{tpu_custom_call.1} parent=0 // pred_fallthru
    _

</llo_original>
